<compile_context>
chip_gen: v5e
topology: v5e:2x2
jax: 0.10.0
libtpu: 0.0.40
codegen_flags: <defaults>
</compile_context>

<pallas_src>
import functools

import jax
import jax.numpy as jnp
from jax import lax
from jax.experimental import pallas as pl
from jax.experimental.pallas import tpu as pltpu

_LANES = 128
_FUSED_CHUNK_ROWS = 1024          # 512 KiB f32 working chunk inside the fused kernel
_MAX_TILE_ROWS = 8192             # cap so the in-kernel f32 working set stays small


# ---------------------------------------------------------------------------
# Generation-aware configuration.
# ---------------------------------------------------------------------------
_CFG_CACHE = None


def _tpu_config():
    """Tile / VMEM budgets per TPU generation (conservative fallback)."""
    global _CFG_CACHE
    if _CFG_CACHE is not None:
        return _CFG_CACHE
    kind = ""
    try:
        kind = jax.devices()[0].device_kind.lower()
    except Exception:
        kind = ""
    cfg = {
        "minmax_tile_bytes": 1 << 20,   # read-only pass, per grid step
        "norm_tile_bytes": 1 << 20,     # read+write pass, per grid step
        "fused_budget": 8 << 20,        # in + out resident in VMEM
        "fused_vmem_limit": None,       # explicit vmem_limit_bytes for fused call
        "num_tc": 1,                    # TensorCores per device
    }
    if "v7" in kind or "tpu7" in kind:
        # 64 MiB physical VMEM, 3.2 TB/s HBM, 2 TensorCores.
        cfg.update(minmax_tile_bytes=4 << 20, norm_tile_bytes=2 << 20,
                   fused_budget=24 << 20, fused_vmem_limit=48 << 20, num_tc=2)
    elif "v6" in kind or "trillium" in kind:
        cfg.update(minmax_tile_bytes=2 << 20, norm_tile_bytes=1 << 20,
                   fused_budget=40 << 20, fused_vmem_limit=96 << 20, num_tc=1)
    elif "v5e" in kind or "v5 lite" in kind or "v5lite" in kind:
        cfg.update(minmax_tile_bytes=1 << 20, norm_tile_bytes=1 << 20,
                   fused_budget=40 << 20, fused_vmem_limit=96 << 20, num_tc=1)
    elif "v4" in kind or "v5p" in kind or "v5" in kind:
        # Megacore generations: 2 TCs, 128 MiB VMEM.
        cfg.update(minmax_tile_bytes=2 << 20, norm_tile_bytes=1 << 20,
                   fused_budget=40 << 20, fused_vmem_limit=96 << 20, num_tc=2)
    _CFG_CACHE = cfg
    return cfg


def _tile_rows_for(tile_bytes, itemsize, rows):
    target = (tile_bytes // (_LANES * itemsize)) // 8 * 8
    target = max(8, min(_MAX_TILE_ROWS, target))
    return min(target, max(8, (rows // 8) * 8))


# ---------------------------------------------------------------------------
# Pass 1 (large tensors): global min/max.
# grid = (splits, inner): `splits` is "parallel" (sharded across TensorCores
# on 2-TC chips), `inner` is the "arbitrary" reduction axis.  Per-split
# (8,128) partials are combined by a tiny XLA reduce in the wrapper.
# ---------------------------------------------------------------------------
def _minmax_kernel(x_ref, min_out_ref, max_out_ref, vmin_ref, vmax_ref, *,
                   tile_rows, valid_tail_rows, blocks, inner_steps, mask_tail):
    i = pl.program_id(1)

    @pl.when(i == 0)
    def _init():
        vmin_ref[...] = jnp.full(vmin_ref.shape, jnp.inf, dtype=jnp.float32)
        vmax_ref[...] = jnp.full(vmax_ref.shape, -jnp.inf, dtype=jnp.float32)

    x = x_ref[...].astype(jnp.float32)
    xf = x.reshape(tile_rows // 8, 8, _LANES)

    if mask_tail:
        # Only the (single) partial tail block needs masking; clamped
        # duplicate reads of full blocks are harmless for min/max.
        c = pl.program_id(0)
        blk = jnp.minimum(c * inner_steps + i, blocks - 1)
        is_tail = blk == blocks - 1

        @pl.when(jnp.logical_not(is_tail))
        def _full():
            vmin_ref[...] = jnp.minimum(vmin_ref[...], jnp.min(xf, axis=0))
            vmax_ref[...] = jnp.maximum(vmax_ref[...], jnp.max(xf, axis=0))

        @pl.when(is_tail)
        def _tail():
            rid = lax.broadcasted_iota(jnp.int32, x.shape, 0)
            ok = rid < valid_tail_rows
            lo = jnp.where(ok, x, jnp.inf).reshape(tile_rows // 8, 8, _LANES)
            hi = jnp.where(ok, x, -jnp.inf).reshape(tile_rows // 8, 8, _LANES)
            vmin_ref[...] = jnp.minimum(vmin_ref[...], jnp.min(lo, axis=0))
            vmax_ref[...] = jnp.maximum(vmax_ref[...], jnp.max(hi, axis=0))
    else:
        vmin_ref[...] = jnp.minimum(vmin_ref[...], jnp.min(xf, axis=0))
        vmax_ref[...] = jnp.maximum(vmax_ref[...], jnp.max(xf, axis=0))

    @pl.when(i == pl.num_programs(1) - 1)
    def _finalize():
        min_out_ref[...] = vmin_ref[...]
        max_out_ref[...] = vmax_ref[...]


def _global_minmax(x2d, cfg, tile_rows=None):
    rows, lanes = x2d.shape
    if tile_rows is None:
        tile_rows = _tile_rows_for(cfg["minmax_tile_bytes"],
                                   x2d.dtype.itemsize, rows)
    assert tile_rows % 8 == 0
    blocks = pl.cdiv(rows, tile_rows)
    # Split the reduction only on chips with >1 TensorCore.
    splits = cfg["num_tc"] if (cfg["num_tc"] > 1 and blocks >= 2 * cfg["num_tc"]) else 1
    inner_steps = pl.cdiv(blocks, splits)
    mask_tail = (rows % tile_rows) != 0
    valid_tail_rows = rows - (blocks - 1) * tile_rows

    kernel = functools.partial(
        _minmax_kernel, tile_rows=tile_rows, valid_tail_rows=valid_tail_rows,
        blocks=blocks, inner_steps=inner_steps, mask_tail=mask_tail)

    def x_map(c, i):
        # Clamp fully-OOB block indices (when blocks % splits != 0); the
        # duplicate reads are harmless for min/max.
        return (jnp.minimum(c * inner_steps + i, blocks - 1), 0)

    min_parts, max_parts = pl.pallas_call(
        kernel,
        out_shape=(
            jax.ShapeDtypeStruct((splits * 8, _LANES), jnp.float32),
            jax.ShapeDtypeStruct((splits * 8, _LANES), jnp.float32),
        ),
        grid_spec=pltpu.PrefetchScalarGridSpec(
            num_scalar_prefetch=0,
            grid=(splits, inner_steps),
            in_specs=[pl.BlockSpec((tile_rows, lanes), x_map)],
            out_specs=(
                pl.BlockSpec((8, _LANES), lambda c, i: (c, 0)),
                pl.BlockSpec((8, _LANES), lambda c, i: (c, 0)),
            ),
            scratch_shapes=[
                pltpu.VMEM((8, _LANES), jnp.float32),
                pltpu.VMEM((8, _LANES), jnp.float32),
            ],
        ),
        compiler_params=pltpu.CompilerParams(
            dimension_semantics=("parallel", "arbitrary")),
    )(x2d)
    return jnp.min(min_parts), jnp.max(max_parts)


# ---------------------------------------------------------------------------
# Pass 2: elementwise  o = x * scale + bias   (scale/bias in one SMEM (1,2)).
# ---------------------------------------------------------------------------
def _normalize_kernel(sb_ref, x_ref, o_ref):
    scale = sb_ref[0, 0]
    bias = sb_ref[0, 1]
    x = x_ref[...].astype(jnp.float32)
    o_ref[...] = (x * scale + bias).astype(o_ref.dtype)


def _normalize(x2d, scale, bias, out_dtype, cfg):
    rows, lanes = x2d.shape
    tile_rows = _tile_rows_for(cfg["norm_tile_bytes"], x2d.dtype.itemsize, rows)
    grid = (pl.cdiv(rows, tile_rows),)
    sb = jnp.stack([jnp.asarray(scale, jnp.float32),
                    jnp.asarray(bias, jnp.float32)]).reshape(1, 2)
    return pl.pallas_call(
        _normalize_kernel,
        out_shape=jax.ShapeDtypeStruct(x2d.shape, out_dtype),
        grid_spec=pltpu.PrefetchScalarGridSpec(
            num_scalar_prefetch=0,
            grid=grid,
            in_specs=[
                pl.BlockSpec((1, 2), lambda i: (0, 0),
                             memory_space=pltpu.MemorySpace.SMEM),
                pl.BlockSpec((tile_rows, lanes), lambda i: (i, 0)),
            ],
            out_specs=pl.BlockSpec((tile_rows, lanes), lambda i: (i, 0)),
        ),
        compiler_params=pltpu.CompilerParams(
            dimension_semantics=("parallel",)),
    )(sb, x2d)


# ---------------------------------------------------------------------------
# Fused path (range_intra, tensor resident in VMEM): 1 HBM read + 1 HBM write.
# Chunked VPU min/max fold to (8,128) + single tiny cross-lane reduce, then a
# chunked normalize loop (bounded IR size regardless of resident block size).
# ---------------------------------------------------------------------------
def _fused_kernel(x_ref, o_ref, *, rows, sup_lim, inf_lim):
    chunk = min(_FUSED_CHUNK_ROWS, (rows // 8) * 8)
    nfull = rows // chunk if chunk >= 8 else 0
    done = nfull * chunk
    tail = rows - done

    lo = jnp.full((8, _LANES), jnp.inf, dtype=jnp.float32)
    hi = jnp.full((8, _LANES), -jnp.inf, dtype=jnp.float32)

    if nfull:
        def fold(i, carry):
            lo_c, hi_c = carry
            r0 = pl.multiple_of(i * chunk, 8)
            xc = x_ref[pl.ds(r0, chunk), :].astype(jnp.float32)
            b = xc.reshape(chunk // 8, 8, _LANES)
            return (jnp.minimum(lo_c, jnp.min(b, axis=0)),
                    jnp.maximum(hi_c, jnp.max(b, axis=0)))
        lo, hi = lax.fori_loop(0, nfull, fold, (lo, hi))

    if tail:
        xt = x_ref[pl.ds(done, tail), :].astype(jnp.float32)
        t8 = (tail // 8) * 8
        if t8:
            b = xt[:t8].reshape(t8 // 8, 8, _LANES)
            lo = jnp.minimum(lo, jnp.min(b, axis=0))
            hi = jnp.maximum(hi, jnp.max(b, axis=0))
        if t8 < tail:
            rest = xt[t8:]
            lo = jnp.minimum(lo, jnp.min(rest, axis=0, keepdims=True))
            hi = jnp.maximum(hi, jnp.max(rest, axis=0, keepdims=True))

    mn = jnp.min(lo)
    mx = jnp.max(hi)
    denom = mx - mn
    # Guard the degenerate constant-tensor case (PyTorch would give NaN/Inf).
    denom = denom + (denom == 0.0).astype(jnp.float32)
    scale = (sup_lim - inf_lim) / denom
    bias = inf_lim - mn * scale

    if nfull:
        @pl.loop(0, nfull)
        def _norm(i):
            r0 = pl.multiple_of(i * chunk, 8)
            xc = x_ref[pl.ds(r0, chunk), :].astype(jnp.float32)
            o_ref[pl.ds(r0, chunk), :] = (xc * scale + bias).astype(o_ref.dtype)
    if tail:
        xt2 = x_ref[pl.ds(done, tail), :].astype(jnp.float32)
        o_ref[pl.ds(done, tail), :] = (xt2 * scale + bias).astype(o_ref.dtype)


def _fused_normalize(x2d, sup_lim, inf_lim, out_dtype, cfg):
    rows, _ = x2d.shape
    kernel = functools.partial(_fused_kernel, rows=rows,
                               sup_lim=float(sup_lim), inf_lim=float(inf_lim))
    kwargs = {}
    if cfg["fused_vmem_limit"] is not None:
        kwargs["compiler_params"] = pltpu.CompilerParams(
            vmem_limit_bytes=cfg["fused_vmem_limit"])
    return pl.pallas_call(
        kernel,
        out_shape=jax.ShapeDtypeStruct(x2d.shape, out_dtype),
        **kwargs,
    )(x2d)


def _scale_bias(mn, mx, sup_lim, inf_lim):
    mn = jnp.asarray(mn, jnp.float32)
    mx = jnp.asarray(mx, jnp.float32)
    denom = mx - mn
    denom = denom + (denom == 0.0).astype(jnp.float32)   # constant-tensor guard
    scale = (sup_lim - inf_lim) / denom
    bias = inf_lim - mn * scale
    return scale, bias


class NormalizeInRange:
    """JAX/Pallas port of the PyTorch NormalizeInRange module."""

    def __init__(self, supLim, infLim, type_n, max_p, min_p):
        self.supLim = supLim
        self.infLim = infLim
        self.type_n = type_n
        self.max_p = max_p
        self.min_p = min_p

    def __repr__(self):
        return ("NormalizeInRange(supLim={}, infLim = {}, type_n = {}, "
                "max_p = {}, min_p = {})").format(
                    self.supLim, self.infLim, self.type_n, self.max_p, self.min_p)

    def __call__(self, img):
        if self.type_n not in ("range_intra", "range_inter"):
            return img  # identity branch, no compute

        img = jnp.asarray(img)
        orig_shape = img.shape
        orig_dtype = img.dtype
        out_dtype = (orig_dtype if jnp.issubdtype(orig_dtype, jnp.floating)
                     else jnp.float32)
        total = img.size
        if total == 0:
            return img.astype(out_dtype)
        sup = float(self.supLim)
        inf = float(self.infLim)
        cfg = _tpu_config()

        flat = img.reshape(-1)
        pad = (-total) % _LANES
        if pad:
            # Edge replication keeps min/max unchanged; padded outputs sliced
            # off below.  (See TODO(synk) at top for the pad-free 1-D path.)
            flat = jnp.pad(flat, (0, pad), mode="edge")
        rows = flat.size // _LANES
        x2d = flat.reshape(rows, _LANES)

        if self.type_n == "range_intra":
            in_b = x2d.size * x2d.dtype.itemsize
            out_b = x2d.size * jnp.dtype(out_dtype).itemsize
            resident = in_b + out_b + (2 << 20)          # + chunk temp headroom
            if resident <= cfg["fused_budget"]:
                out2d = _fused_normalize(x2d, sup, inf, out_dtype, cfg)
            else:
                mn, mx = _global_minmax(x2d, cfg)
                scale, bias = _scale_bias(mn, mx, sup, inf)
                out2d = _normalize(x2d, scale, bias, out_dtype, cfg)
        else:  # range_inter
            scale, bias = _scale_bias(self.min_p, self.max_p, sup, inf)
            out2d = _normalize(x2d, scale, bias, out_dtype, cfg)

        out = out2d.reshape(-1)
        if pad:
            out = out[:total]
        return out.reshape(orig_shape)


if __name__ == "__main__":
    key = jax.random.PRNGKey(0)
    k1, k2, k3, k4 = jax.random.split(key, 4)

    # Primary NCHW shape implied by the module's usage.
    x = jax.random.normal(k1, (2, 4, 16, 16), dtype=jnp.float32) * 3.0 + 1.0

    # range_intra (fused VMEM-resident path)
    mod_intra = NormalizeInRange(supLim=1.0, infLim=0.0, type_n="range_intra",
                                 max_p=None, min_p=None)
    y_intra = jax.block_until_ready(mod_intra(x))
    ref_intra = (x - jnp.min(x)) / (jnp.max(x) - jnp.min(x)) * 1.0 + 0.0
    assert jnp.allclose(y_intra, ref_intra, atol=1e-5, rtol=1e-5)
    assert float(jnp.min(y_intra)) >= -1e-6
    assert float(jnp.max(y_intra)) <= 1.0 + 1e-6

    # range_inter (externally provided min/max)
    mod_inter = NormalizeInRange(supLim=1.0, infLim=-1.0, type_n="range_inter",
                                 max_p=12.0, min_p=-12.0)
    y_inter = jax.block_until_ready(mod_inter(x))
    ref_inter = (x - (-12.0)) / (12.0 - (-12.0)) * (1.0 - (-1.0)) + (-1.0)
    assert jnp.allclose(y_inter, ref_inter, atol=1e-5, rtol=1e-5)

    # identity branch
    mod_none = NormalizeInRange(1.0, 0.0, "none", None, None)
    assert jnp.array_equal(jax.block_until_ready(mod_none(x)), x)

    # Odd-sized input (total not a multiple of 128): fused-path tail handling
    # plus the pad/slice wrapper path.
    xo = jax.random.normal(k2, (2, 3, 5, 7), dtype=jnp.float32)
    yo = jax.block_until_ready(mod_intra(xo))
    refo = (xo - jnp.min(xo)) / (jnp.max(xo) - jnp.min(xo))
    assert jnp.allclose(yo, refo, atol=1e-5, rtol=1e-5)

    # Directly exercise the two-pass tiled path (multi-block reduction with a
    # ragged tail block and, on multi-TC chips, the 2-way split), independent
    # of the fused-budget routing, using a small forced tile.
    cfg = _tpu_config()
    x2d = jax.random.normal(k3, (4504, 128), dtype=jnp.float32) * 5.0 - 2.0
    mn, mx = _global_minmax(x2d, cfg, tile_rows=1024)
    assert jnp.allclose(mn, jnp.min(x2d)) and jnp.allclose(mx, jnp.max(x2d))
    scale, bias = _scale_bias(mn, mx, 1.0, 0.0)
    y2d = jax.block_until_ready(_normalize(x2d, scale, bias, jnp.float32, cfg))
    ref2d = (x2d - jnp.min(x2d)) / (jnp.max(x2d) - jnp.min(x2d))
    assert jnp.allclose(y2d, ref2d, atol=1e-5, rtol=1e-5)

    # bf16 input through the fused path (dtype-aware sizing, cast-back store,
    # chunked fold with a non-chunk-multiple row count).
    xb = jax.random.normal(k4, (4, 9, 128, 128), dtype=jnp.float32).astype(jnp.bfloat16)
    yb = jax.block_until_ready(mod_intra(xb))
    xb32 = xb.astype(jnp.float32)
    refb = (xb32 - jnp.min(xb32)) / (jnp.max(xb32) - jnp.min(xb32))
    assert jnp.allclose(yb.astype(jnp.float32), refb, atol=2e-2, rtol=2e-2)
    assert float(jnp.min(y2d)) >= -1e-6 and float(jnp.max(y2d)) <= 1.0 + 1e-6

    print("KERNEL_OK")
</pallas_src>

<mosaic_0001>
module attributes {stable_mosaic.version = 11 : i64} {
  func.func @_fused_kernel(%arg0: memref<16x128xf32, #tpu.memory_space<vmem>>, %arg1: memref<16x128xf32, #tpu.memory_space<vmem>>) attributes {dimension_semantics = [], scalar_prefetch = 0 : i64, scratch_operands = 0 : i64, tpu.core_type = #tpu.core_type<tc>} {
    %cst = arith.constant 0x7F800000 : f32
    %0 = vector.broadcast %cst : f32 to vector<8x128xf32>
    %cst_0 = arith.constant 0xFF800000 : f32
    %1 = vector.broadcast %cst_0 : f32 to vector<8x128xf32>
    %c0_i32 = arith.constant 0 : i32
    %c16_i32 = arith.constant 16 : i32
    %2 = arith.muli %c0_i32, %c16_i32 : i32
    %3 = tpu.assume_multiple %2, 8 : i32
    %4 = arith.index_cast %3 : i32 to index
    %c0 = arith.constant 0 : index
    %5 = vector.load %arg0[%4, %c0] : memref<16x128xf32, #tpu.memory_space<vmem>>, vector<16x128xf32>
    %6 = vector.shape_cast %5 : vector<16x128xf32> to vector<2x8x128xf32>
    %cst_1 = arith.constant dense<0x7F800000> : vector<8x128xf32>
    %7 = vector.multi_reduction <minimumf>, %6, %cst_1 [0] : vector<2x8x128xf32> to vector<8x128xf32>
    %8 = arith.minimumf %0, %7 : vector<8x128xf32>
    %cst_2 = arith.constant dense<0xFF800000> : vector<8x128xf32>
    %9 = vector.multi_reduction <maximumf>, %6, %cst_2 [0] : vector<2x8x128xf32> to vector<8x128xf32>
    %10 = arith.maximumf %1, %9 : vector<8x128xf32>
    %c1_i32 = arith.constant 1 : i32
    %11 = vector.shape_cast %8 : vector<8x128xf32> to vector<1x8x128xf32>
    %cst_3 = arith.constant dense<0x7F800000> : vector<1xf32>
    %12 = vector.multi_reduction <minimumf>, %11, %cst_3 [1, 2] : vector<1x8x128xf32> to vector<1xf32>
    %13 = vector.shape_cast %12 : vector<1xf32> to vector<1x1x1xf32>
    %14 = vector.extract %13[0, 0, 0] : f32 from vector<1x1x1xf32>
    %15 = vector.shape_cast %10 : vector<8x128xf32> to vector<1x8x128xf32>
    %cst_4 = arith.constant dense<0xFF800000> : vector<1xf32>
    %16 = vector.multi_reduction <maximumf>, %15, %cst_4 [1, 2] : vector<1x8x128xf32> to vector<1xf32>
    %17 = vector.shape_cast %16 : vector<1xf32> to vector<1x1x1xf32>
    %18 = vector.extract %17[0, 0, 0] : f32 from vector<1x1x1xf32>
    %19 = arith.subf %18, %14 : f32
    %cst_5 = arith.constant 0.000000e+00 : f32
    %20 = arith.cmpf oeq, %19, %cst_5 : f32
    %21 = arith.extui %20 : i1 to i32
    %22 = arith.sitofp %21 : i32 to f32
    %23 = arith.addf %19, %22 : f32
    %cst_6 = arith.constant 1.000000e+00 : f32
    %24 = arith.divf %cst_6, %23 : f32
    %25 = arith.mulf %14, %24 : f32
    %cst_7 = arith.constant 0.000000e+00 : f32
    %26 = arith.subf %cst_7, %25 : f32
    %c0_i32_8 = arith.constant 0 : i32
    %c1_i32_9 = arith.constant 1 : i32
    %27 = arith.muli %c0_i32_8, %c1_i32_9 : i32
    %c0_i32_10 = arith.constant 0 : i32
    %28 = arith.addi %c0_i32_10, %27 : i32
    %c16_i32_11 = arith.constant 16 : i32
    %29 = arith.muli %28, %c16_i32_11 : i32
    %30 = tpu.assume_multiple %29, 8 : i32
    %31 = arith.index_cast %30 : i32 to index
    %c0_12 = arith.constant 0 : index
    %32 = vector.load %arg0[%31, %c0_12] : memref<16x128xf32, #tpu.memory_space<vmem>>, vector<16x128xf32>
    %33 = vector.broadcast %24 : f32 to vector<16x128xf32>
    %34 = arith.mulf %32, %33 : vector<16x128xf32>
    %35 = vector.broadcast %26 : f32 to vector<16x128xf32>
    %36 = arith.addf %34, %35 : vector<16x128xf32>
    %37 = arith.index_cast %30 : i32 to index
    %c0_13 = arith.constant 0 : index
    %38 = vector.load %arg1[%37, %c0_13] : memref<16x128xf32, #tpu.memory_space<vmem>>, vector<16x128xf32>
    tpu.vector_store %arg1[%37, %c0_13], %36 {strides = array<i32>} : memref<16x128xf32, #tpu.memory_space<vmem>>, vector<16x128xf32>,
    %c1_i32_14 = arith.constant 1 : i32
    return
  }
}

</mosaic_0001>

<llo_original>
// kernel: tpu_custom_call.1
$region0: #{tpu_custom_call.1}
  #allocation0 [shape = 'u32[]', space=smem, size = 0x4, offset = 0x4, fixed_abs, tag = 'smem constant byte address 0x4 - core index']
  #allocation1 [shape = 'u32[72,128]{1,0:T(1,128)}', space=vmem, size = 0x9000, scoped, tag = 'internal scratch']
  %s0 = inlined_call_operand.hbm [shape: f32[16,128], index: 0, kind: input, shape index: {}]
  %s1 = inlined_call_operand.hbm [shape: f32[16,128], index: 1, kind: output, shape index: {}]
  %s2 = sld [smem:[#allocation0]]
  $region18: #{tpu_custom_call.1} parent=0
    _
  %s4 = ssub.s32 1, %s2
  %s5 = scalar_select 0, %s4, %s2
  $region1: #{tpu_custom_call.1} parent=0
    #allocation2 [shape = 'u8[8192]{0}', space=vmem, size = 0x2000, scoped, tag = 'input window, operand 0, single buffered']
    #allocation3 [shape = 's32[1]{0}', space=sflag, size = 0x4, scoped, tag = 'scoped memory for tpu_custom_call.1']
    #allocation4 [shape = 's32[1]{0}', space=sflag, size = 0x4, scoped, tag = 'scoped memory for tpu_custom_call.1']
    #allocation5 [shape = 'u8[8192]{0}', space=vmem, size = 0x2000, scoped, tag = 'output window, operand 0, single buffered']
    %6 = vsyncpa [#allocation3], 0
    %7 = vsyncpa [#allocation4], 0
    // Predicated region
    $region2: #{tpu_custom_call.1} parent=1 // pred_check
      _
    $region3: #{tpu_custom_call.1} parent=1 // pred_check_branch
      %9 = sbr.rel (0) target = $region5
    $region4: #{tpu_custom_call.1} parent=1 // pred_region
      %11 = vsyncadd [#allocation3], 0
      %s12 = sshll.u32 %s0, 4
      %s13 = int_to_ptr.hbm [resolvable:$true] %s12
      %s14 = sshll.u32 [#allocation2], 4
      %s15 = int_to_ptr.vmem [resolvable:$true] %s14
      %20 = dma.hbm_to_vmem [thread:$0]  %s13, 256, %s15, [#allocation3], 128, 128, 8
    $region5: #{tpu_custom_call.1} parent=1 // pred_fallthru
      _
    // Predicated region
    $region6: #{tpu_custom_call.1} parent=1 // pred_check
      _
    $region7: #{tpu_custom_call.1} parent=1 // pred_check_branch
      %22 = sbr.rel (0) target = $region9
    $region8: #{tpu_custom_call.1} parent=1 // pred_region
      %24 = dma.done [#allocation3], 256
    $region9: #{tpu_custom_call.1} parent=1 // pred_fallthru
      _
    %v25 = vld [vmem:[#allocation2] sm:$0xff]
    %v26 = vld [vmem:[#allocation2 + $0x8] sm:$0xff]
    %v27 = vmin.f32 %v25, %v26
    %v28 = vmax.f32 %v25, %v26
    %29 = vmin.xlane.f32.xlu0 %v27
    %v30 = vpop.xlane.xlu0 %29
    %v31 = vrot.slane %v30, 4
    %v32 = vmin.f32 %v30, %v31
    %v33 = vrot.slane %v32, 2
    %v34 = vmin.f32 %v32, %v33
    %v35 = vrot.slane %v34, 1
    %v36 = vmin.f32 %v34, %v35
    %s37 = vtos %v36
    %38 = vmax.xlane.f32.xlu0 %v28
    %v39 = vpop.xlane.xlu0 %38
    %v40 = vrot.slane %v39, 4
    %v41 = vmax.f32 %v39, %v40
    %v42 = vrot.slane %v41, 2
    %v43 = vmax.f32 %v41, %v42
    %v44 = vrot.slane %v43, 1
    %v45 = vmax.f32 %v43, %v44
    %s46 = vtos %v45
    %s47 = ssub.f32 %s46, %s37
    %p48 = scmp.eq.f32.partialorder %s47, 0.0
    %s49 = scalar_select %p48, 1, 0
    %s50 = scvt.s32.f32 %s49
    %s51 = sadd.f32 %s47, %s50
    %v52 = vstv %s51
    %v53 = vrcp.pop %v52
    %v54 = vmul.f32 %v52, %v53
    %v55 = vsub.f32 1.0, %v54
    %v56 = vmul.f32 %v53, %v55
    %v57 = vadd.f32 %v53, %v56
    %vm58 = vweird.f32 %v52
    %vm59 = vweird.f32 %v53
    %vm60 = vmor %vm58, %vm59
    %v61 = vsel %vm60, %v53, %v57
    %v62 = vand.u32 2147483647, %v52
    %vm63 = vcmp.eq.f32.partialorder %v62, 8.507059e+37
    %v64 = vand.u32 %v52, 2147483648
    %v65 = vor.u32 1.1754944e-38, %v64
    %v66 = vsel %vm63, %v65, %v61
    %s67 = vtos %v66
    %s68 = smul.f32 %s37, %s67
    %s69 = ssub.f32 0.0, %s68
    %v70 = vstv %s67
    %v71 = vmul.f32 %v25, %v70
    %v72 = vmul.f32 %v26, %v70
    %v73 = vstv %s69
    %v74 = vadd.f32 %v71, %v73
    %v75 = vadd.f32 %v72, %v73
    %76 = vst [vmem:[#allocation5] sm:$0xff] %v74
    %77 = vst [vmem:[#allocation5 + $0x8] sm:$0xff] %v75
    // Predicated region
    $region10: #{tpu_custom_call.1} parent=1 // pred_check
      _
    $region11: #{tpu_custom_call.1} parent=1 // pred_check_branch
      %79 = sbr.rel (0) target = $region13
    $region12: #{tpu_custom_call.1} parent=1 // pred_region
      %81 = vsyncadd [#allocation4], 0
      %s82 = sshll.u32 [#allocation5], 4
      %s83 = int_to_ptr.vmem [resolvable:$true] %s82
      %s84 = sshll.u32 %s1, 4
      %s85 = int_to_ptr.hbm [resolvable:$true] %s84
      %90 = dma.vmem_to_hbm [thread:$0]  %s83, 256, %s85, [#allocation4], 128, 128, 8
    $region13: #{tpu_custom_call.1} parent=1 // pred_fallthru
      _
    // Predicated region
    $region14: #{tpu_custom_call.1} parent=1 // pred_check
      _
    $region15: #{tpu_custom_call.1} parent=1 // pred_check_branch
      %92 = sbr.rel (0) target = $region17
    $region16: #{tpu_custom_call.1} parent=1 // pred_region
      %94 = dma.done [#allocation4], 256
    $region17: #{tpu_custom_call.1} parent=1 // pred_fallthru
      _
    %95 = vsyncpa [#allocation3], 1
    %96 = vsyncpa [#allocation4], 1

</llo_original>
